<compile_context>
chip_gen: v7x
topology: tpu7x:2x2x1
jax: 0.10.0
libtpu: 0.0.40
codegen_flags: <defaults>
</compile_context>

<pallas_src>
import jax
import jax.numpy as jnp
from jax.experimental import pallas as pl
from jax.experimental.pallas import tpu as pltpu


def decoder_kernel(x_ref, w12_ref, vecs_ref, o_ref):
    # x_ref:    [B, T, DE]   (DE on lanes, T on sublanes)
    # w12_ref:  [DE, E]      fused (Linear1 ∘ Linear2) weight, pre-scaled by 1/T
    # vecs_ref: [3, E]       row 0: fused bias b12, row 1: gamma, row 2: beta
    x = x_ref[...]

    # --- AdaptiveAvgPool1d(1) + Squeeze(-1): time pooling as a sublane SUM
    #     (the 1/T mean scale is folded into w12) ---
    pooled = jnp.sum(x, axis=1)                               # [B, DE]

    # --- Fused Linear(DE, DE) -> Linear(DE, E): single MXU matmul + fused bias ---
    y2 = jnp.dot(pooled, w12_ref[...],
                 preferred_element_type=jnp.float32) + vecs_ref[0:1, :]   # [B, E]

    # --- BatchNorm1d(E), training-mode batch statistics (biased variance, one pass) ---
    mu = jnp.mean(y2, axis=0, keepdims=True)                  # [1, E]
    ex2 = jnp.mean(y2 * y2, axis=0, keepdims=True)            # [1, E]
    var = ex2 - mu * mu
    y3 = (y2 - mu) * jax.lax.rsqrt(var + 1e-5)
    y3 = y3 * vecs_ref[1:2, :] + vecs_ref[2:3, :]

    # --- ReLU ---
    o_ref[...] = jnp.maximum(y3, 0.0)


def prepare_decoder_params(w1, b1, w2, b2, gamma, beta, T):
    """Static (weight-only) prep: fuse the two Linears and the 1/T pooling scale."""
    w12 = (w1.T @ w2.T) / T                                   # [DE, E]
    b12 = b1 @ w2.T + b2                                      # [1, E]
    vecs = jnp.concatenate([b12, gamma, beta], axis=0)        # [3, E]
    return w12, vecs


def decoder_forward(encodings, w12, vecs):
    """encodings: [B, DE, T] (PyTorch layout). Returns [B, E]."""
    B, DE, T = encodings.shape
    E = w12.shape[1]
    # Present DE on the lane axis to the kernel (single cheap wrapper transpose).
    x_btd = jnp.transpose(encodings, (0, 2, 1))               # [B, T, DE]
    vmem = pl.BlockSpec(memory_space=pltpu.MemorySpace.VMEM)
    return pl.pallas_call(
        decoder_kernel,
        out_shape=jax.ShapeDtypeStruct((B, E), jnp.float32),
        in_specs=[vmem, vmem, vmem],
        out_specs=vmem,
    )(x_btd, w12, vecs)


def _reference(encodings, w1, b1, w2, b2, gamma, beta):
    """Unfused pure-JAX reference of the same forward pass (PyTorch semantics)."""
    pooled = jnp.mean(encodings, axis=-1)                     # [B, DE]
    y1 = pooled @ w1.T + b1                                   # Linear(DE, DE)
    y2 = y1 @ w2.T + b2                                       # Linear(DE, E)
    mu = jnp.mean(y2, axis=0, keepdims=True)
    var = jnp.mean((y2 - mu) ** 2, axis=0, keepdims=True)
    y3 = (y2 - mu) / jnp.sqrt(var + 1e-5) * gamma + beta
    return jnp.maximum(y3, 0.0)


if __name__ == "__main__":
    B, DE, T, E = 4, 32, 16, 16  # batch, encoder output size, frames, embedding size

    key = jax.random.PRNGKey(0)
    k_x, k_w1, k_b1, k_w2, k_b2 = jax.random.split(key, 5)

    encodings = jax.random.normal(k_x, (B, DE, T), dtype=jnp.float32)

    # Deterministic xavier-uniform-ish init for the two Linear layers (PyTorch layout [out, in]).
    lim1 = (6.0 / (DE + DE)) ** 0.5
    w1 = jax.random.uniform(k_w1, (DE, DE), minval=-lim1, maxval=lim1, dtype=jnp.float32)
    b1 = jax.random.uniform(k_b1, (1, DE), minval=-lim1, maxval=lim1, dtype=jnp.float32)

    lim2 = (6.0 / (DE + E)) ** 0.5
    w2 = jax.random.uniform(k_w2, (E, DE), minval=-lim2, maxval=lim2, dtype=jnp.float32)
    b2 = jax.random.uniform(k_b2, (1, E), minval=-lim2, maxval=lim2, dtype=jnp.float32)

    # BatchNorm1d(E) affine params (PyTorch default init: gamma=1, beta=0).
    gamma = jnp.ones((1, E), dtype=jnp.float32)
    beta = jnp.zeros((1, E), dtype=jnp.float32)

    # Static weight fusion (done once; weights don't change per call).
    w12, vecs = prepare_decoder_params(w1, b1, w2, b2, gamma, beta, T)

    out = decoder_forward(encodings, w12, vecs)
    out = jax.block_until_ready(out)

    ref = _reference(encodings, w1, b1, w2, b2, gamma, beta)
    assert out.shape == (B, E)
    assert jnp.allclose(out, ref, atol=1e-4, rtol=1e-4)

    print("KERNEL_OK")
</pallas_src>

<mosaic_0001>
module attributes {stable_mosaic.version = 11 : i64} {
  func.func @decoder_kernel(%arg0: memref<4x16x32xf32, #tpu.memory_space<vmem>>, %arg1: memref<32x16xf32, #tpu.memory_space<vmem>>, %arg2: memref<3x16xf32, #tpu.memory_space<vmem>>, %arg3: memref<4x16xf32, #tpu.memory_space<vmem>>) attributes {dimension_semantics = [], scalar_prefetch = 0 : i64, scratch_operands = 0 : i64, tpu.core_type = #tpu.core_type<tc>} {
    %c0 = arith.constant 0 : index
    %c0_0 = arith.constant 0 : index
    %c0_1 = arith.constant 0 : index
    %0 = vector.load %arg0[%c0, %c0_0, %c0_1] : memref<4x16x32xf32, #tpu.memory_space<vmem>>, vector<4x16x32xf32>
    %cst = arith.constant dense<0.000000e+00> : vector<4x32xf32>
    %1 = vector.multi_reduction <add>, %0, %cst [1] : vector<4x16x32xf32> to vector<4x32xf32>
    %c0_2 = arith.constant 0 : index
    %c0_3 = arith.constant 0 : index
    %2 = vector.load %arg1[%c0_2, %c0_3] : memref<32x16xf32, #tpu.memory_space<vmem>>, vector<32x16xf32>
    %cst_4 = arith.constant dense<0.000000e+00> : vector<4x16xf32>
    %3 = tpu.matmul %1, %2, %cst_4 {dimension_numbers = #tpu.dot_dimension_numbers<[1], [0], [0], [1], [0, 0, 1, 1], [], []>} : vector<4x32xf32>, vector<32x16xf32>, vector<4x16xf32> -> vector<4x16xf32>
    %c0_5 = arith.constant 0 : index
    %c0_6 = arith.constant 0 : index
    %4 = vector.load %arg2[%c0_5, %c0_6] : memref<3x16xf32, #tpu.memory_space<vmem>>, vector<1x16xf32>
    %5 = vector.broadcast %4 : vector<1x16xf32> to vector<4x16xf32>
    %6 = arith.addf %3, %5 : vector<4x16xf32>
    %cst_7 = arith.constant dense<0.000000e+00> : vector<16xf32>
    %7 = vector.multi_reduction <add>, %6, %cst_7 [0] : vector<4x16xf32> to vector<16xf32>
    %8 = vector.shape_cast %7 : vector<16xf32> to vector<1x16xf32>
    %cst_8 = arith.constant 4.000000e+00 : f32
    %9 = vector.broadcast %cst_8 : f32 to vector<1x16xf32>
    %10 = arith.divf %8, %9 : vector<1x16xf32>
    %11 = arith.mulf %6, %6 : vector<4x16xf32>
    %cst_9 = arith.constant dense<0.000000e+00> : vector<16xf32>
    %12 = vector.multi_reduction <add>, %11, %cst_9 [0] : vector<4x16xf32> to vector<16xf32>
    %13 = vector.shape_cast %12 : vector<16xf32> to vector<1x16xf32>
    %cst_10 = arith.constant 4.000000e+00 : f32
    %14 = vector.broadcast %cst_10 : f32 to vector<1x16xf32>
    %15 = arith.divf %13, %14 : vector<1x16xf32>
    %16 = arith.mulf %10, %10 : vector<1x16xf32>
    %17 = arith.subf %15, %16 : vector<1x16xf32>
    %18 = vector.broadcast %10 : vector<1x16xf32> to vector<4x16xf32>
    %19 = arith.subf %6, %18 : vector<4x16xf32>
    %cst_11 = arith.constant 9.99999974E-6 : f32
    %20 = vector.broadcast %cst_11 : f32 to vector<1x16xf32>
    %21 = arith.addf %17, %20 : vector<1x16xf32>
    %22 = math.rsqrt %21 : vector<1x16xf32>
    %23 = vector.broadcast %22 : vector<1x16xf32> to vector<4x16xf32>
    %24 = arith.mulf %19, %23 : vector<4x16xf32>
    %c1 = arith.constant 1 : index
    %c0_12 = arith.constant 0 : index
    %25 = vector.load %arg2[%c1, %c0_12] : memref<3x16xf32, #tpu.memory_space<vmem>>, vector<1x16xf32>
    %26 = vector.broadcast %25 : vector<1x16xf32> to vector<4x16xf32>
    %27 = arith.mulf %24, %26 : vector<4x16xf32>
    %c2 = arith.constant 2 : index
    %c0_13 = arith.constant 0 : index
    %28 = vector.load %arg2[%c2, %c0_13] : memref<3x16xf32, #tpu.memory_space<vmem>>, vector<1x16xf32>
    %29 = vector.broadcast %28 : vector<1x16xf32> to vector<4x16xf32>
    %30 = arith.addf %27, %29 : vector<4x16xf32>
    %cst_14 = arith.constant 0.000000e+00 : f32
    %31 = vector.broadcast %cst_14 : f32 to vector<4x16xf32>
    %32 = arith.maximumf %30, %31 : vector<4x16xf32>
    %c0_15 = arith.constant 0 : index
    %c0_16 = arith.constant 0 : index
    %33 = vector.load %arg3[%c0_15, %c0_16] : memref<4x16xf32, #tpu.memory_space<vmem>>, vector<4x16xf32>
    tpu.vector_store %arg3[%c0_15, %c0_16], %32 {strides = array<i32>} : memref<4x16xf32, #tpu.memory_space<vmem>>, vector<4x16xf32>,
    return
  }
}

</mosaic_0001>

<llo_original>
// kernel: tpu_custom_call.1
$region0: #{tpu_custom_call.1}
  #allocation0 [shape = 'u32[]', space=smem, size = 0x4, offset = 0x4, fixed_abs, tag = 'smem constant byte address 0x4 - core index']
  #allocation1 [shape = 'u32[144,128]{1,0:T(1,128)}', space=vmem, size = 0x12000, scoped, tag = 'internal scratch']
  %s0 = inlined_call_operand.hbm [shape: f32[4,16,32], index: 0, kind: input, shape index: {}]
  %s1 = inlined_call_operand.vmem [shape: f32[32,16], index: 1, kind: input, shape index: {}]
  %s2 = inlined_call_operand.vmem [shape: f32[3,16], index: 2, kind: input, shape index: {}]
  %s3 = inlined_call_operand.hbm [shape: f32[4,16], index: 3, kind: output, shape index: {}]
  %s4 = sld [smem:[#allocation0]]
  $region26: #{tpu_custom_call.1} parent=0
    _
  %s6 = ssub.s32 1, %s4
  %s7 = scalar_select 0, %s6, %s4
  $region1: #{tpu_custom_call.1} parent=0
    #allocation2 [shape = 'u8[32768]{0}', space=vmem, size = 0x8000, scoped, tag = 'input window, operand 0, single buffered']
    #allocation3 [shape = 's32[1]{0}', space=sflag, size = 0x4, scoped, tag = 'scoped memory for tpu_custom_call.1']
    #allocation4 [shape = 's32[1]{0}', space=sflag, size = 0x4, scoped, tag = 'scoped memory for tpu_custom_call.1']
    #allocation5 [shape = 'u8[2048]{0}', space=vmem, size = 0x800, scoped, tag = 'output window, operand 0, single buffered']
    %8 = vsyncpa [#allocation3], 0
    %9 = vsyncpa [#allocation4], 0
    // Predicated region
    $region2: #{tpu_custom_call.1} parent=1 // pred_check
      _
    $region3: #{tpu_custom_call.1} parent=1 // pred_check_branch
      %11 = sbr.rel (0) target = $region5
    $region4: #{tpu_custom_call.1} parent=1 // pred_region
      %s13 = ssub.s32 1024, 1024
      %14 = vsyncadd [#allocation3], %s13
      %s15 = sshll.u32 [#allocation2], 4
      %s16 = int_to_ptr.vmem [resolvable:$true] %s15
      %21 = dma.hbm_to_vmem [thread:$0]  %s0, 1024, %s16, [#allocation3], 128, 128, 8
    $region5: #{tpu_custom_call.1} parent=1 // pred_fallthru
      _
    // Predicated region
    $region6: #{tpu_custom_call.1} parent=1 // pred_check
      _
    $region7: #{tpu_custom_call.1} parent=1 // pred_check_branch
      %23 = sbr.rel (0) target = $region9
    $region8: #{tpu_custom_call.1} parent=1 // pred_region
      _
    $region9: #{tpu_custom_call.1} parent=1 // pred_fallthru
      _
    // Predicated region
    $region10: #{tpu_custom_call.1} parent=1 // pred_check
      _
    $region11: #{tpu_custom_call.1} parent=1 // pred_check_branch
      %25 = sbr.rel (0) target = $region13
    $region12: #{tpu_custom_call.1} parent=1 // pred_region
      _
    $region13: #{tpu_custom_call.1} parent=1 // pred_fallthru
      _
    // Predicated region
    $region14: #{tpu_custom_call.1} parent=1 // pred_check
      _
    $region15: #{tpu_custom_call.1} parent=1 // pred_check_branch
      %27 = sbr.rel (0) target = $region17
    $region16: #{tpu_custom_call.1} parent=1 // pred_region
      %28 = dma.done [#allocation3], 1024
    $region17: #{tpu_custom_call.1} parent=1 // pred_fallthru
      _
    %v29 = vld [vmem:[#allocation2] sm:$0xff]
    %v30 = vld [vmem:[#allocation2 + $0x8] sm:$0xff]
    %v31 = vld [vmem:[#allocation2 + $0x10] sm:$0xff]
    %v32 = vld [vmem:[#allocation2 + $0x18] sm:$0xff]
    %v33 = vld [vmem:[#allocation2 + $0x20] sm:$0xff]
    %v34 = vld [vmem:[#allocation2 + $0x28] sm:$0xff]
    %v35 = vld [vmem:[#allocation2 + $0x30] sm:$0xff]
    %v36 = vld [vmem:[#allocation2 + $0x38] sm:$0xff]
    %vm37 = vcmask 261120
    %v38 = vsel %vm37, %v29, 0.0
    %v39 = vsel %vm37, %v30, 0.0
    %v40 = vadd.f32 %v38, %v39
    %v41 = vrot.slane %v40, 4
    %v42 = vadd.f32 %v40, %v41
    %v43 = vrot.slane %v42, 2
    %v44 = vadd.f32 %v42, %v43
    %v45 = vrot.slane %v44, 1
    %v46 = vadd.f32 %v44, %v45
    %v47 = vsel %vm37, %v31, 0.0
    %v48 = vsel %vm37, %v32, 0.0
    %v49 = vadd.f32 %v47, %v48
    %v50 = vrot.slane %v49, 4
    %v51 = vadd.f32 %v49, %v50
    %v52 = vrot.slane %v51, 2
    %v53 = vadd.f32 %v51, %v52
    %v54 = vrot.slane %v53, 1
    %v55 = vadd.f32 %v53, %v54
    %v56 = vsel %vm37, %v33, 0.0
    %v57 = vsel %vm37, %v34, 0.0
    %v58 = vadd.f32 %v56, %v57
    %v59 = vrot.slane %v58, 4
    %v60 = vadd.f32 %v58, %v59
    %v61 = vrot.slane %v60, 2
    %v62 = vadd.f32 %v60, %v61
    %v63 = vrot.slane %v62, 1
    %v64 = vadd.f32 %v62, %v63
    %v65 = vsel %vm37, %v35, 0.0
    %v66 = vsel %vm37, %v36, 0.0
    %v67 = vadd.f32 %v65, %v66
    %v68 = vrot.slane %v67, 4
    %v69 = vadd.f32 %v67, %v68
    %v70 = vrot.slane %v69, 2
    %v71 = vadd.f32 %v69, %v70
    %v72 = vrot.slane %v71, 1
    %v73 = vadd.f32 %v71, %v72
    %v74 = vld [vmem:[%s1] sm:$0xff]
    %v75 = vld [vmem:[%s1 + $0x8] sm:$0xff]
    %v76 = vld [vmem:[%s1 + $0x10] sm:$0xff]
    %v77 = vld [vmem:[%s1 + $0x18] sm:$0xff]
    %v78 = vld [vmem:[%s2] sm:$0x1]
    %v79 = vlaneseq
    %v80 = vshrl.u32 %v79, 7
    %v81 = vsub.s32 0, %v80
    %v82 = vrot.slane %v78, %v81
    %vm87 = vcmask 1041409
    %v88 = vsel %vm87, %v55, %v46
    %vm89 = vcmask 1042434
    %v90 = vsel %vm89, %v64, %v88
    %vm91 = vcmask 1043459
    %v92 = vsel %vm91, %v73, %v90
    %v93 = vsel %vm37, %v92, 0
    %95 = vmatprep.subr.mxu0 0.0
    %96 = vmatpush1.msra.mxu0 %v74
    %97 = vmatprep.subr.mxu0 0.0
    %98 = vmatpush1.msra.mxu0 %v75
    %99 = vmatprep.subr.mxu0 0.0
    %100 = vmatpush1.msra.mxu0 %v76
    %101 = vmatprep.subr.mxu0 0.0
    %102 = vmatpush1.msra.mxu0 %v77
    %103 = vmatprep.subr.mxu0 0.0
    %104 = vmatpush1.msra.mxu0 0.0
    %105 = vmatprep.subr.mxu0 0.0
    %106 = vmatpush1.msra.mxu0 0.0
    %107 = vmatprep.subr.mxu0 0.0
    %108 = vmatpush1.msra.mxu0 0.0
    %109 = vmatprep.subr.mxu0 0.0
    %110 = vmatpush1.msra.mxu0 0.0
    %111 = vmatprep.subr.mxu0 0.0
    %112 = vmatpush1.msra.mxu0 0.0
    %113 = vmatprep.subr.mxu0 0.0
    %114 = vmatpush1.msra.mxu0 0.0
    %115 = vmatprep.subr.mxu0 0.0
    %116 = vmatpush1.msra.mxu0 0.0
    %117 = vmatprep.subr.mxu0 0.0
    %118 = vmatpush1.msra.mxu0 0.0
    %119 = vmatprep.subr.mxu0 0.0
    %120 = vmatpush1.msra.mxu0 0.0
    %121 = vmatprep.subr.mxu0 0.0
    %122 = vmatpush1.msra.mxu0 0.0
    %123 = vmatprep.subr.mxu0 0.0
    %124 = vmatpush1.msra.mxu0 0.0
    %125 = vmatprep.subr.mxu0 0.0
    %126 = vmatpush1.msra.mxu0 0.0
    %127 = vmatprep.subr.mxu0 0.0
    %128 = vmatpush1.msra.mxu0 0.0
    %129 = vmatprep.subr.mxu0 0.0
    %130 = vmatpush1.msra.mxu0 0.0
    %131 = vmatprep.subr.mxu0 0.0
    %132 = vmatpush1.msra.mxu0 0.0
    %133 = vmatprep.subr.mxu0 0.0
    %134 = vmatpush1.msra.mxu0 0.0
    %135 = vmatprep.subr.mxu0 0.0
    %136 = vmatpush1.msra.mxu0 0.0
    %137 = vmatprep.subr.mxu0 0.0
    %138 = vmatpush1.msra.mxu0 0.0
    %139 = vmatprep.subr.mxu0 0.0
    %140 = vmatpush1.msra.mxu0 0.0
    %141 = vmatprep.subr.mxu0 0.0
    %142 = vmatpush1.msra.mxu0 0.0
    %143 = vmatprep.subr.mxu0 0.0
    %144 = vmatpush1.msra.mxu0 0.0
    %145 = vmatprep.subr.mxu0 0.0
    %146 = vmatpush1.msra.mxu0 0.0
    %147 = vmatprep.subr.mxu0 0.0
    %148 = vmatpush1.msra.mxu0 0.0
    %149 = vmatprep.subr.mxu0 0.0
    %150 = vmatpush1.msra.mxu0 0.0
    %151 = vmatprep.subr.mxu0 0.0
    %152 = vmatpush1.msra.mxu0 0.0
    %153 = vmatprep.subr.mxu0 0.0
    %154 = vmatpush1.msra.mxu0 0.0
    %155 = vmatprep.subr.mxu0 0.0
    %156 = vmatpush1.msra.mxu0 0.0
    %157 = vmatprep.subr.mxu0 0.0
    %158 = vmatpush1.msra.mxu0 0.0
    %159 = vmatprep.mubr.f32.mxu0 0.0
    %160 = vmatmul.mubr.f32.gmra.mrb[0].mxu0 %v93
    %v161 = vpop.f32.mrb[0].mxu0
    %v162 = vadd.f32 %v82, %v161
    %v163 = vpop.f32.mrb[0].mxu0
    %164 = vdwg.mxu0
    %vm165 = vcmask 125952
    %v166 = vsel %vm165, %v162, 0.0
    %v167 = vrot.slane %v166, 4
    %v168 = vadd.f32 %v166, %v167
    %v169 = vrot.slane %v168, 2
    %v170 = vadd.f32 %v168, %v169
    %v171 = vrot.slane %v170, 1
    %v172 = vadd.f32 %v170, %v171
    %v173 = vrcp.pop 4.0
    %v174 = vmul.f32 %v172, %v173
    %v175 = vmul.f32 %v162, %v162
    %v176 = vsel %vm165, %v175, 0.0
    %v177 = vrot.slane %v176, 4
    %v178 = vadd.f32 %v176, %v177
    %v179 = vrot.slane %v178, 2
    %v180 = vadd.f32 %v178, %v179
    %v181 = vrot.slane %v180, 1
    %v182 = vadd.f32 %v180, %v181
    %v183 = vmul.f32 %v182, %v173
    %v184 = vmul.f32 %v174, %v174
    %v185 = vsub.f32 %v183, %v184
    %v186 = vsub.f32 %v162, %v174
    %v187 = vadd.f32 %v185, 1e-05
    %v188 = vrsqrt.pop %v187
    %v189 = vmul.f32 %v186, %v188
    %v190 = vld [vmem:[%s2 + $0x1] sm:$0x1]
    %v191 = vlaneseq
    %v192 = vshrl.u32 %v191, 7
    %v193 = vsub.s32 0, %v192
    %v194 = vrot.slane %v190, %v193
    %v195 = vmul.f32 %v189, %v194
    %v196 = vld [vmem:[%s2 + $0x2] sm:$0x1]
    %v197 = vlaneseq
    %v198 = vshrl.u32 %v197, 7
    %v199 = vsub.s32 0, %v198
    %v200 = vrot.slane %v196, %v199
    %v201 = vadd.f32 %v195, %v200
    %v202 = vmax.f32 %v201, 0.0
    %203 = vst.msk [vmem:[#allocation5] sm:$0xf] %vm165, %v202
    // Predicated region
    $region18: #{tpu_custom_call.1} parent=1 // pred_check
      _
    $region19: #{tpu_custom_call.1} parent=1 // pred_check_branch
      %205 = sbr.rel (0) target = $region21
    $region20: #{tpu_custom_call.1} parent=1 // pred_region
      %s207 = ssub.s32 64, 64
      %208 = vsyncadd [#allocation4], %s207
      %s210 = sshll.u32 [#allocation5], 4
      %s211 = int_to_ptr.vmem [resolvable:$true] %s210
      %213 = dma.vmem_to_hbm [thread:$0]  %s211, 64, %s3, [#allocation4]
    $region21: #{tpu_custom_call.1} parent=1 // pred_fallthru
      _
    // Predicated region
    $region22: #{tpu_custom_call.1} parent=1 // pred_check
      _
    $region23: #{tpu_custom_call.1} parent=1 // pred_check_branch
      %215 = sbr.rel (0) target = $region25
    $region24: #{tpu_custom_call.1} parent=1 // pred_region
      %216 = dma.done [#allocation4], 64
    $region25: #{tpu_custom_call.1} parent=1 // pred_fallthru
      _
    %217 = vsyncpa [#allocation3], 1
    %218 = vsyncpa [#allocation4], 1

</llo_original>
